<compile_context>
chip_gen: v5e
topology: v5e:2x2
jax: 0.10.0
libtpu: 0.0.40
codegen_flags: <defaults>
</compile_context>

<pallas_src>
import jax
import jax.numpy as jnp
from jax.experimental import pallas as pl
from jax.experimental.pallas import tpu as pltpu


# --------------------------------------------------------------------------- #
# Kernel
# --------------------------------------------------------------------------- #
def _lora_linear_kernel(x_ref, wt_ref, u_ref, at_ref, bias_ref, o_ref, acc_ref):
    k = pl.program_id(2)

    @pl.when(k == 0)
    def _init():
        # Low-rank correction, exactly once per output tile:
        #   corr = u[m_tile] @ A.T[:, n_tile], with u = x @ B.T hoisted to XLA.
        # Operands stay in the compute dtype (bf16 recommended); f32 accumulate.
        corr = jnp.dot(u_ref[...], at_ref[...],
                       preferred_element_type=jnp.float32)
        # Fold bias into the accumulator init (saves a VPU pass at finalize).
        acc_ref[...] = corr + bias_ref[...]

    # Hot loop: streamed x @ W.T, f32 accumulation on the MXU.
    acc_ref[...] += jnp.dot(x_ref[...], wt_ref[...],
                            preferred_element_type=jnp.float32)

    @pl.when(k == pl.num_programs(2) - 1)
    def _finalize():
        o_ref[...] = acc_ref[...].astype(o_ref.dtype)


# --------------------------------------------------------------------------- #
# Small helpers
# --------------------------------------------------------------------------- #
def _round_up(x, m):
    return ((x + m - 1) // m) * m


def _sublane(dtype):
    """Sublane pack factor for a dtype (rows per vreg tile)."""
    return {4: 8, 2: 16, 1: 32}.get(jnp.dtype(dtype).itemsize, 8)


def _pick_tile(dim, target):
    """Largest multiple of 128 that divides `dim` (a 128-multiple) and <= target."""
    best = 128
    for t in range(128, min(target, dim) + 1, 128):
        if dim % t == 0:
            best = t
    return best


def _pad2(a, s0, s1):
    """Zero-pad a 2D array to (s0, s1); no-op (no HBM copy) if already that shape."""
    if a.shape == (s0, s1):
        return a
    return jnp.pad(a, ((0, s0 - a.shape[0]), (0, s1 - a.shape[1])))


# --------------------------------------------------------------------------- #
# Weight preparation (do this ONCE per weight set, reuse across forward calls)
# --------------------------------------------------------------------------- #
def prepare_lora_weights(A, B, W, bias, compute_dtype=None):
    """Transpose / cast / pad the static operands once (outside the hot path).

    A: (F, r); B: (r, F); W: (F, F); bias: (F,).  Returns a dict of prepared
    arrays + metadata consumed by `lora_layer_forward_prepared`.
    """
    F_out, F_in = W.shape
    assert F_out == F_in, "LoRALayer is only well-defined for a square weight"
    F = F_in
    r = A.shape[-1]
    assert A.shape == (F, r) and B.shape == (r, F) and bias.shape == (F,)

    cdt = jnp.dtype(compute_dtype) if compute_dtype is not None else jnp.dtype(W.dtype)
    sub = _sublane(cdt)
    F_pad = _round_up(F, 128)
    r_pad = _round_up(r, sub)

    Wt_p = _pad2(W.T.astype(cdt), F_pad, F_pad)      # kernel does x @ Wt
    At_p = _pad2(A.T.astype(cdt), r_pad, F_pad)      # (r_pad, F_pad)
    Bt = B.T.astype(cdt)                             # (F, r) -- used in XLA for u
    bias_p = _pad2(bias.reshape(1, F).astype(jnp.float32), 1, F_pad)  # f32

    return dict(Wt=Wt_p, At=At_p, Bt=Bt, bias=bias_p,
                F=F, r=r, F_pad=F_pad, r_pad=r_pad, cdt=cdt)


# --------------------------------------------------------------------------- #
# Forward
# --------------------------------------------------------------------------- #
def lora_layer_forward_prepared(x, params, *,
                                tm_target=512, tn_target=512, tk_target=1024,
                                input_buffers=2):
    """y = x @ (A @ B + W).T + bias, using weights prepared by
    `prepare_lora_weights`.  x: (..., F).

    Per-chip tm_target guidance: ~256 (v5e), ~384-512 (v7x), ~512-1024 (v6e,
    large-M).  `input_buffers` > 2 enables deeper pipelining on x / W.T.
    """
    F, F_pad, r_pad, cdt = params["F"], params["F_pad"], params["r_pad"], params["cdt"]
    assert x.shape[-1] == F

    lead = x.shape[:-1]
    out_dtype = x.dtype
    x2d = x.reshape(-1, F).astype(cdt)
    M = x2d.shape[0]

    # Tile selection (lane-dense, sublane-packed).
    sub = _sublane(cdt)
    tm = max(sub, min(_round_up(M, sub), _round_up(tm_target, sub)))
    M_pad = _round_up(M, tm)
    tn_t = tn_target
    if F_pad >= 256:
        tn_t = min(tn_t, F_pad // 2)   # keep >= 2 N blocks -> both v7x TCs busy
    tn = _pick_tile(F_pad, tn_t)
    tk = _pick_tile(F_pad, tk_target)

    # Hoisted low-rank projection: u = x @ B.T, shape (M, r) -- tiny, one XLA pass.
    u = jnp.dot(x2d, params["Bt"], preferred_element_type=jnp.float32).astype(cdt)

    x_p = _pad2(x2d, M_pad, F_pad)
    u_p = _pad2(u, M_pad, r_pad)
    Wt_p, At_p, bias_p = params["Wt"], params["At"], params["bias"]

    grid = (M_pad // tm, F_pad // tn, F_pad // tk)

    # Advisory cost estimate (kernel-side work only; u is computed in XLA).
    flops = (2 * M_pad * F_pad * F_pad            # x @ W.T
             + 2 * M_pad * r_pad * F_pad)         # u @ A.T (once per output elem)
    bytes_accessed = sum(a.size * a.dtype.itemsize
                         for a in (x_p, Wt_p, u_p, At_p, bias_p))
    bytes_accessed += M_pad * F_pad * jnp.dtype(out_dtype).itemsize

    # VMEM footprint estimate -> raise the scoped limit only when needed.
    itm = jnp.dtype(cdt).itemsize
    vmem_est = (2 * (tm * tk + tk * tn + tm * r_pad + r_pad * tn) * itm  # inputs, 2-buf
                + 2 * tn * 4                                            # bias (f32), 2-buf
                + 2 * tm * tn * jnp.dtype(out_dtype).itemsize           # out, 2-buf
                + tm * tn * 4)                                          # f32 accumulator
    cp_kwargs = dict(dimension_semantics=("parallel", "parallel", "arbitrary"))
    if vmem_est > 12 * 1024 * 1024:
        cp_kwargs["vmem_limit_bytes"] = int(min(max(int(vmem_est * 1.5), 32 << 20),
                                                64 << 20))

    stream_kwargs = {}
    if input_buffers != 2:
        stream_kwargs["pipeline_mode"] = pl.Buffered(input_buffers)

    out = pl.pallas_call(
        _lora_linear_kernel,
        out_shape=jax.ShapeDtypeStruct((M_pad, F_pad), out_dtype),
        grid_spec=pltpu.PrefetchScalarGridSpec(
            num_scalar_prefetch=0,
            grid=grid,
            in_specs=[
                pl.BlockSpec((tm, tk), lambda m, n, k: (m, k), **stream_kwargs),  # x
                pl.BlockSpec((tk, tn), lambda m, n, k: (k, n), **stream_kwargs),  # W.T
                pl.BlockSpec((tm, r_pad), lambda m, n, k: (m, 0)),                # u
                pl.BlockSpec((r_pad, tn), lambda m, n, k: (0, n)),                # A.T
                pl.BlockSpec((1, tn), lambda m, n, k: (0, n)),                    # bias
            ],
            out_specs=pl.BlockSpec((tm, tn), lambda m, n, k: (m, n)),
            scratch_shapes=[pltpu.VMEM((tm, tn), jnp.float32)],                   # f32 acc
        ),
        compiler_params=pltpu.CompilerParams(**cp_kwargs),
        cost_estimate=pl.CostEstimate(flops=flops, transcendentals=0,
                                      bytes_accessed=bytes_accessed),
    )(x_p, Wt_p, u_p, At_p, bias_p)

    return out[:M, :F].reshape(*lead, F)


def lora_layer_forward(x, A, B, W, bias, **kwargs):
    """Convenience one-shot entry point.  For repeated calls (inference /
    training steps), call `prepare_lora_weights` once and reuse the result
    with `lora_layer_forward_prepared` so the W.T transpose + cast + pad is
    not re-done on every invocation."""
    params = prepare_lora_weights(A, B, W, bias, compute_dtype=x.dtype)
    return lora_layer_forward_prepared(x, params, **kwargs)


# --------------------------------------------------------------------------- #
# Demo / correctness check
# --------------------------------------------------------------------------- #
if __name__ == "__main__":
    key = jax.random.PRNGKey(0)
    k_x, k_a, k_b, k_w, k_bias = jax.random.split(key, 5)

    batch, seq, hidden, rank = 2, 8, 32, 4   # original_layer = nn.Linear(32, 32)

    x = jax.random.normal(k_x, (batch, seq, hidden), dtype=jnp.float32)
    A = jax.random.normal(k_a, (hidden, rank), dtype=jnp.float32)    # Parameter(randn(out, r))
    B = jax.random.normal(k_b, (rank, hidden), dtype=jnp.float32)    # Parameter(randn(r, in))
    W = jax.random.normal(k_w, (hidden, hidden), dtype=jnp.float32)  # original_layer.weight
    bias = jax.random.normal(k_bias, (hidden,), dtype=jnp.float32)   # original_layer.bias

    hi = jax.lax.Precision.HIGHEST

    def ref(x_, A_, B_, W_, b_):
        adapted = jnp.dot(A_, B_, precision=hi) + W_
        y_ = jnp.dot(x_.reshape(-1, hidden), adapted.T, precision=hi) + b_
        return y_.reshape(batch, seq, hidden)

    # --- f32 path (matches the PyTorch module's default dtype) ---
    # NOTE: kernel matmuls use default MXU precision (bf16-class passes); loose
    # tolerance below reflects that.  Pass f32 inputs through a HIGHEST-precision
    # XLA path instead if bitwise-f32 accuracy is required.
    y32 = jax.block_until_ready(lora_layer_forward(x, A, B, W, bias))
    y32_ref = ref(x, A, B, W, bias)
    assert y32.shape == (batch, seq, hidden)
    assert jnp.allclose(y32, y32_ref, atol=2e-1, rtol=2e-2)

    # --- bf16 path with weights prepared ONCE and reused (recommended usage) ---
    xb, Ab, Bb, Wb = (t.astype(jnp.bfloat16) for t in (x, A, B, W))
    prepared = prepare_lora_weights(Ab, Bb, Wb, bias, compute_dtype=jnp.bfloat16)
    yb = jax.block_until_ready(lora_layer_forward_prepared(xb, prepared))
    yb2 = jax.block_until_ready(lora_layer_forward_prepared(xb, prepared))  # reuse prep
    yb_ref = ref(xb.astype(jnp.float32), Ab.astype(jnp.float32),
                 Bb.astype(jnp.float32), Wb.astype(jnp.float32), bias)
    assert yb.dtype == jnp.bfloat16
    assert jnp.allclose(yb.astype(jnp.float32), yb_ref, atol=2e-1, rtol=2e-2)
    assert jnp.allclose(yb.astype(jnp.float32), yb2.astype(jnp.float32))

    # TODO(synk): optional fp8-weight path for v7x (halves the W HBM stream again).
    print("KERNEL_OK")
</pallas_src>

<mosaic_0001>
module attributes {stable_mosaic.version = 11 : i64} {
  func.func @_lora_linear_kernel(%arg0: i32, %arg1: i32, %arg2: i32, %arg3: memref<16x128xf32, #tpu.memory_space<vmem>>, %arg4: memref<128x128xf32, #tpu.memory_space<vmem>>, %arg5: memref<16x8xf32, #tpu.memory_space<vmem>>, %arg6: memref<8x128xf32, #tpu.memory_space<vmem>>, %arg7: memref<1x128xf32, #tpu.memory_space<vmem>>, %arg8: memref<16x128xf32, #tpu.memory_space<vmem>>, %arg9: memref<16x128xf32, #tpu.memory_space<vmem>>) attributes {dimension_semantics = [#tpu.dimension_semantics<parallel>, #tpu.dimension_semantics<parallel>, #tpu.dimension_semantics<arbitrary>], iteration_bounds = array<i64: 1, 1, 1>, scalar_prefetch = 0 : i64, scratch_operands = 1 : i64, tpu.core_type = #tpu.core_type<tc>, window_params = [{transform_indices = @transform_0, window_bounds = array<i64: 16, 128>}, {transform_indices = @transform_1, window_bounds = array<i64: 128, 128>}, {transform_indices = @transform_2, window_bounds = array<i64: 16, 8>}, {transform_indices = @transform_3, window_bounds = array<i64: 8, 128>}, {transform_indices = @transform_4, window_bounds = array<i64: 1, 128>}, {transform_indices = @transform_5, window_bounds = array<i64: 16, 128>}]} {
    %c0_i32 = arith.constant 0 : i32
    %0 = arith.cmpi eq, %arg2, %c0_i32 : i32
    %1 = arith.extui %0 : i1 to i32
    %c0_i32_0 = arith.constant 0 : i32
    %2 = arith.cmpi ne, %1, %c0_i32_0 : i32
    scf.if %2 {
      %c0_10 = arith.constant 0 : index
      %c0_11 = arith.constant 0 : index
      %12 = vector.load %arg5[%c0_10, %c0_11] : memref<16x8xf32, #tpu.memory_space<vmem>>, vector<16x8xf32>
      %c0_12 = arith.constant 0 : index
      %c0_13 = arith.constant 0 : index
      %13 = vector.load %arg6[%c0_12, %c0_13] : memref<8x128xf32, #tpu.memory_space<vmem>>, vector<8x128xf32>
      %cst_14 = arith.constant dense<0.000000e+00> : vector<16x128xf32>
      %14 = tpu.matmul %12, %13, %cst_14 {dimension_numbers = #tpu.dot_dimension_numbers<[1], [0], [0], [1], [0, 0, 1, 1], [], []>} : vector<16x8xf32>, vector<8x128xf32>, vector<16x128xf32> -> vector<16x128xf32>
      %c0_15 = arith.constant 0 : index
      %c0_16 = arith.constant 0 : index
      %15 = vector.load %arg7[%c0_15, %c0_16] : memref<1x128xf32, #tpu.memory_space<vmem>>, vector<1x128xf32>
      %16 = vector.broadcast %15 : vector<1x128xf32> to vector<16x128xf32>
      %17 = arith.addf %14, %16 : vector<16x128xf32>
      %c0_17 = arith.constant 0 : index
      %c0_18 = arith.constant 0 : index
      %18 = vector.load %arg9[%c0_17, %c0_18] : memref<16x128xf32, #tpu.memory_space<vmem>>, vector<16x128xf32>
      tpu.vector_store %arg9[%c0_17, %c0_18], %17 {strides = array<i32>} : memref<16x128xf32, #tpu.memory_space<vmem>>, vector<16x128xf32>,
    } else {
    }
    %c0 = arith.constant 0 : index
    %c0_1 = arith.constant 0 : index
    %3 = vector.load %arg9[%c0, %c0_1] : memref<16x128xf32, #tpu.memory_space<vmem>>, vector<16x128xf32>
    %c0_2 = arith.constant 0 : index
    %c0_3 = arith.constant 0 : index
    %4 = vector.load %arg3[%c0_2, %c0_3] : memref<16x128xf32, #tpu.memory_space<vmem>>, vector<16x128xf32>
    %c0_4 = arith.constant 0 : index
    %c0_5 = arith.constant 0 : index
    %5 = vector.load %arg4[%c0_4, %c0_5] : memref<128x128xf32, #tpu.memory_space<vmem>>, vector<128x128xf32>
    %cst = arith.constant dense<0.000000e+00> : vector<16x128xf32>
    %6 = tpu.matmul %4, %5, %cst {dimension_numbers = #tpu.dot_dimension_numbers<[1], [0], [0], [1], [0, 0, 1, 1], [], []>} : vector<16x128xf32>, vector<128x128xf32>, vector<16x128xf32> -> vector<16x128xf32>
    %7 = arith.addf %3, %6 : vector<16x128xf32>
    %c0_6 = arith.constant 0 : index
    %c0_7 = arith.constant 0 : index
    %8 = vector.load %arg9[%c0_6, %c0_7] : memref<16x128xf32, #tpu.memory_space<vmem>>, vector<16x128xf32>
    tpu.vector_store %arg9[%c0_6, %c0_7], %7 {strides = array<i32>} : memref<16x128xf32, #tpu.memory_space<vmem>>, vector<16x128xf32>,
    %c0_i32_8 = arith.constant 0 : i32
    %9 = arith.cmpi eq, %arg2, %c0_i32_8 : i32
    %10 = arith.extui %9 : i1 to i32
    %c0_i32_9 = arith.constant 0 : i32
    %11 = arith.cmpi ne, %10, %c0_i32_9 : i32
    scf.if %11 {
      %c0_10 = arith.constant 0 : index
      %c0_11 = arith.constant 0 : index
      %12 = vector.load %arg9[%c0_10, %c0_11] : memref<16x128xf32, #tpu.memory_space<vmem>>, vector<16x128xf32>
      %c0_12 = arith.constant 0 : index
      %c0_13 = arith.constant 0 : index
      %13 = vector.load %arg8[%c0_12, %c0_13] : memref<16x128xf32, #tpu.memory_space<vmem>>, vector<16x128xf32>
      tpu.vector_store %arg8[%c0_12, %c0_13], %12 {strides = array<i32>} : memref<16x128xf32, #tpu.memory_space<vmem>>, vector<16x128xf32>,
    } else {
    }
    return
  }
  func.func @transform_0(%arg0: i32, %arg1: i32, %arg2: i32) -> (i32, i32) {
    %c0_i32 = arith.constant 0 : i32
    return %arg0, %arg2 : i32, i32
  }
  func.func @transform_1(%arg0: i32, %arg1: i32, %arg2: i32) -> (i32, i32) {
    %c0_i32 = arith.constant 0 : i32
    return %arg2, %arg1 : i32, i32
  }
  func.func @transform_2(%arg0: i32, %arg1: i32, %arg2: i32) -> (i32, i32) {
    %c0_i32 = arith.constant 0 : i32
    %c0_i32_0 = arith.constant 0 : i32
    return %arg0, %c0_i32 : i32, i32
  }
  func.func @transform_3(%arg0: i32, %arg1: i32, %arg2: i32) -> (i32, i32) {
    %c0_i32 = arith.constant 0 : i32
    %c0_i32_0 = arith.constant 0 : i32
    return %c0_i32, %arg1 : i32, i32
  }
  func.func @transform_4(%arg0: i32, %arg1: i32, %arg2: i32) -> (i32, i32) {
    %c0_i32 = arith.constant 0 : i32
    %c0_i32_0 = arith.constant 0 : i32
    return %c0_i32, %arg1 : i32, i32
  }
  func.func @transform_5(%arg0: i32, %arg1: i32, %arg2: i32) -> (i32, i32) {
    %c0_i32 = arith.constant 0 : i32
    return %arg0, %arg1 : i32, i32
  }
}

</mosaic_0001>

<llo_original>
// kernel: tpu_custom_call.1
$region0: #{tpu_custom_call.1}
  #allocation0 [shape = 'u32[]', space=smem, size = 0x4, offset = 0x4, fixed_abs, tag = 'smem constant byte address 0x4 - core index']
  #allocation1 [shape = 'u32[72,128]{1,0:T(1,128)}', space=vmem, size = 0x9000, scoped, tag = 'internal scratch']
  #allocation2 [shape = 'f32[16,128]{1,0:T(8,128)}', space=vmem, size = 0x2000, scoped, tag = 'scratch operand']
  %s0 = inlined_call_operand.vmem [shape: f32[16,128], index: 0, kind: input, shape index: {}]
  %s1 = inlined_call_operand.hbm [shape: f32[128,128], index: 1, kind: input, shape index: {}]
  %s2 = inlined_call_operand.vmem [shape: f32[16,8], index: 2, kind: input, shape index: {}]
  %s3 = inlined_call_operand.vmem [shape: f32[8,128], index: 3, kind: input, shape index: {}]
  %s4 = inlined_call_operand.vmem [shape: f32[1,128], index: 4, kind: input, shape index: {}]
  %s5 = inlined_call_operand.hbm [shape: f32[16,128], index: 5, kind: output, shape index: {}]
  %s6 = sld [smem:[#allocation0]]
  $region42: #{tpu_custom_call.1} parent=0
    _
  %s8 = ssub.s32 1, %s6
  %s9 = scalar_select 0, %s8, %s6
  $region1: #{tpu_custom_call.1} parent=0
    #allocation3 [shape = 'u8[65536]{0}', space=vmem, size = 0x10000, scoped, tag = 'input window, operand 1, single buffered']
    #allocation4 [shape = 's32[1]{0}', space=sflag, size = 0x4, scoped, tag = 'scoped memory for tpu_custom_call.1']
    #allocation5 [shape = 's32[1]{0}', space=sflag, size = 0x4, scoped, tag = 'scoped memory for tpu_custom_call.1']
    #allocation6 [shape = 'u8[8192]{0}', space=vmem, size = 0x2000, scoped, tag = 'output window, operand 0, single buffered']
    %10 = vsyncpa [#allocation4], 0
    %11 = vsyncpa [#allocation5], 0
    // Predicated region
    $region2: #{tpu_custom_call.1} parent=1 // pred_check
      _
    $region3: #{tpu_custom_call.1} parent=1 // pred_check_branch
      %13 = sbr.rel (0) target = $region5
    $region4: #{tpu_custom_call.1} parent=1 // pred_region
      _
    $region5: #{tpu_custom_call.1} parent=1 // pred_fallthru
      _
    // Predicated region
    $region6: #{tpu_custom_call.1} parent=1 // pred_check
      _
    $region7: #{tpu_custom_call.1} parent=1 // pred_check_branch
      %15 = sbr.rel (0) target = $region9
    $region8: #{tpu_custom_call.1} parent=1 // pred_region
      %17 = vsyncadd [#allocation4], 0
      %s18 = sshll.u32 %s1, 4
      %s19 = int_to_ptr.hbm [resolvable:$true] %s18
      %s20 = sshll.u32 [#allocation3], 4
      %s21 = int_to_ptr.vmem [resolvable:$true] %s20
      %26 = dma.hbm_to_vmem [thread:$0]  %s19, 2048, %s21, [#allocation4], 128, 128, 8
    $region9: #{tpu_custom_call.1} parent=1 // pred_fallthru
      _
    // Predicated region
    $region10: #{tpu_custom_call.1} parent=1 // pred_check
      _
    $region11: #{tpu_custom_call.1} parent=1 // pred_check_branch
      %28 = sbr.rel (0) target = $region13
    $region12: #{tpu_custom_call.1} parent=1 // pred_region
      _
    $region13: #{tpu_custom_call.1} parent=1 // pred_fallthru
      _
    // Predicated region
    $region14: #{tpu_custom_call.1} parent=1 // pred_check
      _
    $region15: #{tpu_custom_call.1} parent=1 // pred_check_branch
      %30 = sbr.rel (0) target = $region17
    $region16: #{tpu_custom_call.1} parent=1 // pred_region
      _
    $region17: #{tpu_custom_call.1} parent=1 // pred_fallthru
      _
    // Predicated region
    $region18: #{tpu_custom_call.1} parent=1 // pred_check
      _
    $region19: #{tpu_custom_call.1} parent=1 // pred_check_branch
      %32 = sbr.rel (0) target = $region21
    $region20: #{tpu_custom_call.1} parent=1 // pred_region
      _
    $region21: #{tpu_custom_call.1} parent=1 // pred_fallthru
      _
    // Predicated region
    $region22: #{tpu_custom_call.1} parent=1 // pred_check
      _
    $region23: #{tpu_custom_call.1} parent=1 // pred_check_branch
      %34 = sbr.rel (0) target = $region25
    $region24: #{tpu_custom_call.1} parent=1 // pred_region
      %36 = dma.done [#allocation4], 2048
    $region25: #{tpu_custom_call.1} parent=1 // pred_fallthru
      _
    %p37 = scmp.eq.s32.totalorder 0, 0
    // Predicated region
    $region26: #{tpu_custom_call.1} parent=1 // pred_check
      %p38 = pneg %p37
    $region27: #{tpu_custom_call.1} parent=1 // pred_check_branch
      %40 = sbr.rel (%p38) target = $region29
    $region28: #{tpu_custom_call.1} parent=1 // pred_region
      %v41 = vld [vmem:[%s2] sm:$0xff]
      %v42 = vld [vmem:[%s2 + $0x8] sm:$0xff]
      %v43 = vld [vmem:[%s3] sm:$0xff]
      %v44 = vld [vmem:[%s4] sm:$0x1]
      %v46 = vperm.slane %v44, 0
      %vm48 = vcmask 64512
      %v50 = vsel %vm48, %v41, 0
      %v53 = vsel %vm48, %v42, 0
      %55 = vmatpush.msra.mxu0 0.0
      %56 = vmatpush.msra.mxu0 0.0
      %57 = vmatpush.msra.mxu0 0.0
      %58 = vmatpush.msra.mxu0 0.0
      %59 = vmatpush.msra.mxu0 0.0
      %60 = vmatpush.msra.mxu0 0.0
      %61 = vmatpush.msra.mxu0 0.0
      %62 = vmatpush.msra.mxu0 0.0
      %63 = vmatpush.msra.mxu0 0.0
      %64 = vmatpush.msra.mxu0 0.0
      %65 = vmatpush.msra.mxu0 0.0
      %66 = vmatpush.msra.mxu0 0.0
      %67 = vmatpush.msra.mxu0 0.0
      %68 = vmatpush.msra.mxu0 0.0
      %69 = vmatpush.msra.mxu0 0.0
      %70 = vmatpush.msra.mxu0 %v43
      %71 = vmatmul.f32.gmra.mxu0 %v50
      %v72 = vpop.f32.mrf.mxu0
      %v73 = vadd.f32 %v46, %v72
      %74 = vmatmul.f32.gmra.mxu0 %v53
      %v75 = vpop.f32.mrf.mxu0
      %v76 = vadd.f32 %v46, %v75
      %77 = vdwg.mxu0
      %78 = vst [vmem:[#allocation2] sm:$0xff] %v73
      %79 = vst [vmem:[#allocation2 + $0x8] sm:$0xff] %v76
    $region29: #{tpu_custom_call.1} parent=1 // pred_fallthru
      _
    %v80 = vld [vmem:[#allocation2] sm:$0xff]
    %v81 = vld [vmem:[#allocation2 + $0x8] sm:$0xff]
    %v82 = vld [vmem:[%s0] sm:$0xff]
    %v83 = vld [vmem:[%s0 + $0x8] sm:$0xff]
    %v84 = vld [vmem:[#allocation3] sm:$0xff]
    %v85 = vld [vmem:[#allocation3 + $0x8] sm:$0xff]
    %v86 = vld [vmem:[#allocation3 + $0x10] sm:$0xff]
    %v87 = vld [vmem:[#allocation3 + $0x18] sm:$0xff]
    %v88 = vld [vmem:[#allocation3 + $0x20] sm:$0xff]
    %v89 = vld [vmem:[#allocation3 + $0x28] sm:$0xff]
    %v90 = vld [vmem:[#allocation3 + $0x30] sm:$0xff]
    %v91 = vld [vmem:[#allocation3 + $0x38] sm:$0xff]
    %v92 = vld [vmem:[#allocation3 + $0x40] sm:$0xff]
    %v93 = vld [vmem:[#allocation3 + $0x48] sm:$0xff]
    %v94 = vld [vmem:[#allocation3 + $0x50] sm:$0xff]
    %v95 = vld [vmem:[#allocation3 + $0x58] sm:$0xff]
    %v96 = vld [vmem:[#allocation3 + $0x60] sm:$0xff]
    %v97 = vld [vmem:[#allocation3 + $0x68] sm:$0xff]
    %v98 = vld [vmem:[#allocation3 + $0x70] sm:$0xff]
    %v99 = vld [vmem:[#allocation3 + $0x78] sm:$0xff]
    %100 = vmatpush.msra.mxu0 %v99
    %101 = vmatpush.msra.mxu0 %v98
    %102 = vmatpush.msra.mxu0 %v97
    %103 = vmatpush.msra.mxu0 %v96
    %104 = vmatpush.msra.mxu0 %v95
    %105 = vmatpush.msra.mxu0 %v94
    %106 = vmatpush.msra.mxu0 %v93
    %107 = vmatpush.msra.mxu0 %v92
    %108 = vmatpush.msra.mxu0 %v91
    %109 = vmatpush.msra.mxu0 %v90
    %110 = vmatpush.msra.mxu0 %v89
    %111 = vmatpush.msra.mxu0 %v88
    %112 = vmatpush.msra.mxu0 %v87
    %113 = vmatpush.msra.mxu0 %v86
    %114 = vmatpush.msra.mxu0 %v85
    %115 = vmatpush.msra.mxu0 %v84
    %116 = vmatmul.f32.gmra.mxu0 %v82
    %v117 = vpop.f32.mrf.mxu0
    %v118 = vadd.f32 0.0, %v117
    %119 = vmatmul.f32.gmra.mxu0 %v83
    %v120 = vpop.f32.mrf.mxu0
    %v121 = vadd.f32 0.0, %v120
    %122 = vdwg.mxu0
    %v123 = vadd.f32 %v80, %v118
    %v124 = vadd.f32 %v81, %v121
    %125 = vst [vmem:[#allocation2] sm:$0xff] %v123
    %126 = vst [vmem:[#allocation2 + $0x8] sm:$0xff] %v124
    // Predicated region
    $region30: #{tpu_custom_call.1} parent=1 // pred_check
      %p127 = pneg %p37
    $region31: #{tpu_custom_call.1} parent=1 // pred_check_branch
      %129 = sbr.rel (%p127) target = $region33
    $region32: #{tpu_custom_call.1} parent=1 // pred_region
      %v130 = vld [vmem:[#allocation2] sm:$0xff]
      %v131 = vld [vmem:[#allocation2 + $0x8] sm:$0xff]
      %132 = vst [vmem:[#allocation6] sm:$0xff] %v130
      %133 = vst [vmem:[#allocation6 + $0x8] sm:$0xff] %v131
    $region33: #{tpu_custom_call.1} parent=1 // pred_fallthru
      _
    // Predicated region
    $region34: #{tpu_custom_call.1} parent=1 // pred_check
      _
    $region35: #{tpu_custom_call.1} parent=1 // pred_check_branch
      %135 = sbr.rel (0) target = $region37
    $region36: #{tpu_custom_call.1} parent=1 // pred_region
      %137 = vsyncadd [#allocation5], 0
      %s138 = sshll.u32 [#allocation6], 4
      %s139 = int_to_ptr.vmem [resolvable:$true] %s138
      %s140 = sshll.u32 %s5, 4
      %s141 = int_to_ptr.hbm [resolvable:$true] %s140
      %146 = dma.vmem_to_hbm [thread:$0]  %s139, 256, %s141, [#allocation5], 128, 128, 8
    $region37: #{tpu_custom_call.1} parent=1 // pred_fallthru
      _
    // Predicated region
    $region38: #{tpu_custom_call.1} parent=1 // pred_check
      _
    $region39: #{tpu_custom_call.1} parent=1 // pred_check_branch
      %148 = sbr.rel (0) target = $region41
    $region40: #{tpu_custom_call.1} parent=1 // pred_region
      %150 = dma.done [#allocation5], 256
    $region41: #{tpu_custom_call.1} parent=1 // pred_fallthru
      _
    %151 = vsyncpa [#allocation4], 1
    %152 = vsyncpa [#allocation5], 1

</llo_original>
